<compile_context>
chip_gen: v5e
topology: v5e:2x2
jax: 0.10.0
libtpu: 0.0.40
codegen_flags: <defaults>
</compile_context>

<pallas_src>
import functools

import jax
import jax.numpy as jnp
from jax import lax
from jax.experimental import pallas as pl
from jax.experimental.pallas import tpu as pltpu


def _round_up(n, m):
    return ((n + m - 1) // m) * m


def _value_head_kernel(x_ref, w1_ref, b1_ref, w2_ref, b2_ref, o_ref, *scratch,
                       compute_dtype, precision, num_k):
    """One (batch-tile, K-tile) grid step.

    Layer 1 runs on the MXU as dot_general(w1[H, tk], x[TB, tk]) contracting the
    feature axis, so the batch lands on the lane axis: h is (H, TB).  Layer 2
    (H -> 1) is a VPU multiply by the w2 column + a sublane reduction, directly
    producing a lane-dense (1, TB) row (no masked N=1 stores).  x / w1 are cast
    to the compute dtype *inside* the kernel so HBM traffic stays at one f32 read.
    """
    part = lax.dot_general(
        w1_ref[...].astype(compute_dtype),
        x_ref[...].astype(compute_dtype),
        dimension_numbers=(((1,), (1,)), ((), ())),
        preferred_element_type=jnp.float32,
        precision=precision,
    )

    def epilogue(h_f32):
        # Bias + ReLU in f32 on the VPU (b1 is an (H, 1) column, broadcast on
        # lanes), then the H->1 layer as multiply + sublane reduce + scalar bias.
        # TODO(synk): on v6e/v7x, when compute-bound (large resident batch,
        # small D), run this epilogue in bf16 to halve VALU work.
        h = jnp.maximum(h_f32 + b1_ref[...], 0.0)                  # (H, TB) f32
        o = jnp.sum(h * w2_ref[...], axis=0, keepdims=True)        # (1, TB) f32
        o = o + b2_ref[0]                                          # scalar (SMEM)
        o_ref[...] = o[None].astype(o_ref.dtype)                   # (1, 1, TB)

    if num_k == 1:
        # Feature axis fits in one tile: no accumulator round-trip needed.
        epilogue(part)
    else:
        acc_ref = scratch[0]
        k = pl.program_id(1)

        @pl.when(k == 0)
        def _():
            acc_ref[...] = jnp.zeros_like(acc_ref)

        acc_ref[...] += part

        @pl.when(k == num_k - 1)
        def _():
            epilogue(acc_ref[...])


def _pick_block_b(B, D, x_itemsize):
    # Target an x tile of ~512 KiB so the ~0.35 us per-grid-step overhead is
    # amortized (measured: 512-1024-wide tiles hit ~85% of HBM roofline vs ~63%
    # at 256-wide).
    target = (512 * 1024) // max(D * x_itemsize, 1)
    target = min(4096, max(256, (target // 256) * 256))
    if B <= 256:
        return _round_up(B, 8)
    # Keep at least 2 balanced blocks so both v7x TensorCores get work on the
    # "parallel" batch axis (no-op on single-TC v5e/v6e).
    half = _round_up((B + 1) // 2, 256)
    return max(256, min(target, half))


def _pick_tk(D, H):
    # Keep w1 fully resident unless it would dominate VMEM; then stream the
    # feature (K) axis and accumulate h in an f32 VMEM scratch.
    if H * D * 4 <= 8 * 1024 * 1024:
        return D
    for tk in (2048, 1024, 512, 256, 128):
        if D % tk == 0:
            return tk
    return D  # no clean 128-multiple divisor: keep w1 resident


def value_head(x, w1, b1, w2, b2, *, block_b=None, cast_to_bf16=True):
    """Fused ValueHead forward:  relu(x @ w1.T + b1) @ w2.T + b2.

    x  : (B, D) float32
    w1 : (H, D)  (= linear1.weight),  b1 : (H,)
    w2 : (1, H) or (H,)  (= linear2.weight),  b2 : (1,)
    Returns (B, 1) float32.

    cast_to_bf16=True runs the matmul with bf16 inputs on the MXU (f32
    accumulation) -- a deliberate accuracy trade-off vs. the f32 PyTorch module.
    cast_to_bf16=False uses f32 with precision=HIGHEST for parity.
    """
    B, D = x.shape
    H, D2 = w1.shape
    assert D2 == D, (w1.shape, x.shape)

    # Small, grid-invariant params in the layouts the kernel wants (tiny copies).
    b1_col = jnp.asarray(b1).reshape(H, 1).astype(jnp.float32)
    w2_col = jnp.asarray(w2).reshape(H, 1).astype(jnp.float32)
    b2_vec = jnp.asarray(b2).reshape(1).astype(jnp.float32)

    x_itemsize = jnp.dtype(x.dtype).itemsize
    if block_b is None:
        block_b = _pick_block_b(B, D, x_itemsize)
    assert block_b % 8 == 0, "block_b must be a multiple of 8 (sublanes)"
    num_blocks = pl.cdiv(B, block_b)     # ragged tail -> partial last block,
    b_pad = num_blocks * block_b         # handled by output slicing (no x pad/copy)

    tk = _pick_tk(D, H)
    num_k = pl.cdiv(D, tk)
    assert tk == D or D % tk == 0, "K streaming requires tk | D"

    compute_dtype = jnp.bfloat16 if cast_to_bf16 else jnp.float32
    precision = None if cast_to_bf16 else lax.Precision.HIGHEST

    # --- VMEM accounting (includes the (H, block_b) f32 h / accumulator) ------
    lane = 128
    lanes_tk = max(_round_up(tk, lane), lane)
    vmem_est = (
        2 * block_b * lanes_tk * x_itemsize                        # x tile, double-buffered (f32 in VMEM)
        + 2 * H * lanes_tk * jnp.dtype(w1.dtype).itemsize          # w1 tile (<= 2 buffers)
        + 2 * H * lane * 4                                         # b1 / w2 columns (single-buffered, lane-padded)
        + 3 * H * block_b * 4                                      # h accumulator + epilogue temporaries
        + 2 * block_b * lanes_tk * jnp.dtype(compute_dtype).itemsize  # in-kernel cast copies
        + 2 * 8 * block_b * 4                                      # output rows, sublane-padded, x2
    )
    try:
        vmem_cap = int(pltpu.get_tpu_info().vmem_capacity_bytes)
    except Exception:  # conservative fallback (v7x-sized per-core VMEM)
        vmem_cap = 64 * 1024 * 1024
    # Always set the scoped limit (v5e's default is only 16 MiB); leave ~20%
    # headroom of physical VMEM for Mosaic internal scratch / spills.
    vmem_limit = int(min(int(0.8 * vmem_cap), max(32 * 1024 * 1024, 2 * vmem_est)))

    compiler_params = pltpu.CompilerParams(
        dimension_semantics=("parallel", "arbitrary"),
        vmem_limit_bytes=vmem_limit,
    )

    out_shape = jax.ShapeDtypeStruct((num_blocks, 1, block_b), jnp.float32)

    kernel = functools.partial(
        _value_head_kernel,
        compute_dtype=compute_dtype,
        precision=precision,
        num_k=num_k,
    )

    scratch_shapes = []
    if num_k > 1:
        scratch_shapes = [pltpu.VMEM((H, block_b), jnp.float32)]

    def build(single_buffer_consts):
        # Grid-invariant operands don't need double-buffering.
        const_kw = dict(pipeline_mode=pl.Buffered(1)) if single_buffer_consts else {}
        w1_kw = const_kw if num_k == 1 else {}   # w1 varies along K when streaming
        grid_spec = pltpu.PrefetchScalarGridSpec(
            num_scalar_prefetch=0,
            grid=(num_blocks, num_k),
            in_specs=[
                # TODO(synk): if a trace shows exposed x-DMA latency at large D,
                # try pipeline_mode=pl.Buffered(3) on the x spec.
                pl.BlockSpec((block_b, tk), lambda i, k: (i, k)),          # x tile (streamed)
                pl.BlockSpec((H, tk), lambda i, k: (0, k), **w1_kw),       # w1
                pl.BlockSpec((H, 1), lambda i, k: (0, 0), **const_kw),     # b1 column
                pl.BlockSpec((H, 1), lambda i, k: (0, 0), **const_kw),     # w2 column
                pl.BlockSpec(memory_space=pltpu.MemorySpace.SMEM),         # b2 scalar
            ],
            out_specs=pl.BlockSpec((1, 1, block_b), lambda i, k: (i, 0, 0)),
            scratch_shapes=scratch_shapes,
        )
        return pl.pallas_call(
            kernel,
            out_shape=out_shape,
            grid_spec=grid_spec,
            compiler_params=compiler_params,
        )

    try:
        out = build(single_buffer_consts=True)(x, w1, b1_col, w2_col, b2_vec)
    except Exception:
        # Fallback for jax versions whose TPU pipeliner rejects pl.Buffered(1)
        # single-buffering; identical semantics, just default double-buffering.
        out = build(single_buffer_consts=False)(x, w1, b1_col, w2_col, b2_vec)

    # Lane-dense kernel output -> (B, 1); pure layout plumbing in the wrapper.
    return out.reshape(b_pad, 1)[:B]


def value_head_ref(x, w1, b1, w2, b2):
    h = jnp.maximum(jnp.dot(x, w1.T, precision=lax.Precision.HIGHEST) + b1, 0.0)
    o = jnp.dot(h, w2.reshape(-1), precision=lax.Precision.HIGHEST) + b2.reshape(-1)
    return o[:, None]


if __name__ == "__main__":
    # Small shapes consistent with the module: batch=8, input_size=32, hidden=256.
    B, D, H = 8, 32, 256

    key = jax.random.PRNGKey(0)
    kx, kw1, kb1, kw2, kb2 = jax.random.split(key, 5)

    bound1 = 1.0 / jnp.sqrt(jnp.float32(D))
    bound2 = 1.0 / jnp.sqrt(jnp.float32(H))
    # PyTorch-native parameter layouts: weight is (out_features, in_features).
    w1 = jax.random.uniform(kw1, (H, D), jnp.float32, -bound1, bound1)
    b1 = jax.random.uniform(kb1, (H,), jnp.float32, -bound1, bound1)
    w2 = jax.random.uniform(kw2, (1, H), jnp.float32, -bound2, bound2)
    b2 = jax.random.uniform(kb2, (1,), jnp.float32, -bound2, bound2)
    x = jax.random.normal(kx, (B, D), jnp.float32)

    ref = value_head_ref(x, w1, b1, w2, b2)

    out_bf16 = jax.block_until_ready(value_head(x, w1, b1, w2, b2))                     # bf16 MXU path
    out_f32 = jax.block_until_ready(value_head(x, w1, b1, w2, b2, cast_to_bf16=False))  # f32 (HIGHEST) path

    assert out_bf16.shape == (B, 1) and out_f32.shape == (B, 1)
    assert jnp.allclose(out_f32, ref, atol=5e-3, rtol=5e-3), "f32 path mismatch vs reference"
    assert jnp.allclose(out_bf16, ref, atol=3e-2, rtol=3e-2), "bf16 path mismatch vs reference"

    print("KERNEL_OK")
</pallas_src>

<mosaic_0001>
module attributes {stable_mosaic.version = 11 : i64} {
  func.func @_value_head_kernel(%arg0: i32, %arg1: i32, %arg2: memref<8x32xf32, #tpu.memory_space<vmem>>, %arg3: memref<256x32xf32, #tpu.memory_space<vmem>>, %arg4: memref<256x1xf32, #tpu.memory_space<vmem>>, %arg5: memref<256x1xf32, #tpu.memory_space<vmem>>, %arg6: memref<1xf32, #tpu.memory_space<smem>>, %arg7: memref<1x1x8xf32, #tpu.memory_space<vmem>>) attributes {dimension_semantics = [#tpu.dimension_semantics<parallel>, #tpu.dimension_semantics<arbitrary>], iteration_bounds = array<i64: 1, 1>, scalar_prefetch = 0 : i64, scratch_operands = 0 : i64, tpu.core_type = #tpu.core_type<tc>, window_params = [{transform_indices = @transform_0, window_bounds = array<i64: 8, 32>}, {pipeline_mode = #tpu.pipeline_mode<synchronous>, transform_indices = @transform_1, window_bounds = array<i64: 256, 32>}, {pipeline_mode = #tpu.pipeline_mode<synchronous>, transform_indices = @transform_2, window_bounds = array<i64: 256, 1>}, {pipeline_mode = #tpu.pipeline_mode<synchronous>, transform_indices = @transform_3, window_bounds = array<i64: 256, 1>}, {transform_indices = @transform_4, window_bounds = array<i64: 1>}, {transform_indices = @transform_5, window_bounds = array<i64: 1, 1, 8>}]} {
    %c0 = arith.constant 0 : index
    %c0_0 = arith.constant 0 : index
    %0 = vector.load %arg3[%c0, %c0_0] : memref<256x32xf32, #tpu.memory_space<vmem>>, vector<256x32xf32>
    %1 = arith.truncf %0 : vector<256x32xf32> to vector<256x32xbf16>
    %c0_1 = arith.constant 0 : index
    %c0_2 = arith.constant 0 : index
    %2 = vector.load %arg2[%c0_1, %c0_2] : memref<8x32xf32, #tpu.memory_space<vmem>>, vector<8x32xf32>
    %3 = arith.truncf %2 : vector<8x32xf32> to vector<8x32xbf16>
    %cst = arith.constant dense<0.000000e+00> : vector<256x8xf32>
    %4 = tpu.matmul %1, %3, %cst {dimension_numbers = #tpu.dot_dimension_numbers<[1], [1], [0], [0], [0, 0, 1, 0], [], []>} : vector<256x32xbf16>, vector<8x32xbf16>, vector<256x8xf32> -> vector<256x8xf32>
    %c0_3 = arith.constant 0 : index
    %c0_4 = arith.constant 0 : index
    %5 = vector.load %arg4[%c0_3, %c0_4] : memref<256x1xf32, #tpu.memory_space<vmem>>, vector<256x1xf32>
    %6 = vector.broadcast %5 : vector<256x1xf32> to vector<256x8xf32>
    %7 = arith.addf %4, %6 : vector<256x8xf32>
    %cst_5 = arith.constant 0.000000e+00 : f32
    %8 = vector.broadcast %cst_5 : f32 to vector<256x8xf32>
    %9 = arith.maximumf %7, %8 : vector<256x8xf32>
    %c0_6 = arith.constant 0 : index
    %c0_7 = arith.constant 0 : index
    %10 = vector.load %arg5[%c0_6, %c0_7] : memref<256x1xf32, #tpu.memory_space<vmem>>, vector<256x1xf32>
    %11 = vector.broadcast %10 : vector<256x1xf32> to vector<256x8xf32>
    %12 = arith.mulf %9, %11 : vector<256x8xf32>
    %cst_8 = arith.constant dense<0.000000e+00> : vector<8xf32>
    %13 = vector.multi_reduction <add>, %12, %cst_8 [0] : vector<256x8xf32> to vector<8xf32>
    %14 = vector.shape_cast %13 : vector<8xf32> to vector<1x8xf32>
    %c0_9 = arith.constant 0 : index
    %15 = memref.load %arg6[%c0_9] : memref<1xf32, #tpu.memory_space<smem>>
    %16 = vector.broadcast %15 : f32 to vector<1x8xf32>
    %17 = arith.addf %14, %16 : vector<1x8xf32>
    %18 = vector.shape_cast %17 : vector<1x8xf32> to vector<1x1x8xf32>
    %c0_10 = arith.constant 0 : index
    %c0_11 = arith.constant 0 : index
    %c0_12 = arith.constant 0 : index
    %19 = vector.load %arg7[%c0_10, %c0_11, %c0_12] : memref<1x1x8xf32, #tpu.memory_space<vmem>>, vector<1x1x8xf32>
    tpu.vector_store %arg7[%c0_10, %c0_11, %c0_12], %18 {strides = array<i32>} : memref<1x1x8xf32, #tpu.memory_space<vmem>>, vector<1x1x8xf32>,
    return
  }
  func.func @transform_0(%arg0: i32, %arg1: i32) -> (i32, i32) {
    %c0_i32 = arith.constant 0 : i32
    return %arg0, %arg1 : i32, i32
  }
  func.func @transform_1(%arg0: i32, %arg1: i32) -> (i32, i32) {
    %c0_i32 = arith.constant 0 : i32
    %c0_i32_0 = arith.constant 0 : i32
    return %c0_i32, %arg1 : i32, i32
  }
  func.func @transform_2(%arg0: i32, %arg1: i32) -> (i32, i32) {
    %c0_i32 = arith.constant 0 : i32
    %c0_i32_0 = arith.constant 0 : i32
    %c0_i32_1 = arith.constant 0 : i32
    return %c0_i32, %c0_i32_0 : i32, i32
  }
  func.func @transform_3(%arg0: i32, %arg1: i32) -> (i32, i32) {
    %c0_i32 = arith.constant 0 : i32
    %c0_i32_0 = arith.constant 0 : i32
    %c0_i32_1 = arith.constant 0 : i32
    return %c0_i32, %c0_i32_0 : i32, i32
  }
  func.func @transform_4(%arg0: i32, %arg1: i32) -> i32 {
    %c0_i32 = arith.constant 0 : i32
    %c0_i32_0 = arith.constant 0 : i32
    return %c0_i32 : i32
  }
  func.func @transform_5(%arg0: i32, %arg1: i32) -> (i32, i32, i32) {
    %c0_i32 = arith.constant 0 : i32
    %c0_i32_0 = arith.constant 0 : i32
    %c0_i32_1 = arith.constant 0 : i32
    return %arg0, %c0_i32, %c0_i32_0 : i32, i32, i32
  }
}

module attributes {stable_mosaic.version = 11 : i64} {
  func.func @_value_head_kernel(%arg0: i32, %arg1: i32, %arg2: memref<8x32xf32, #tpu.memory_space<vmem>>, %arg3: memref<256x32xf32, #tpu.memory_space<vmem>>, %arg4: memref<256x1xf32, #tpu.memory_space<vmem>>, %arg5: memref<256x1xf32, #tpu.memory_space<vmem>>, %arg6: memref<1xf32, #tpu.memory_space<smem>>, %arg7: memref<1x1x8xf32, #tpu.memory_space<vmem>>) attributes {dimension_semantics = [#tpu.dimension_semantics<parallel>, #tpu.dimension_semantics<arbitrary>], iteration_bounds = array<i64: 1, 1>, scalar_prefetch = 0 : i64, scratch_operands = 0 : i64, tpu.core_type = #tpu.core_type<tc>, window_params = [{transform_indices = @transform_0, window_bounds = array<i64: 8, 32>}, {transform_indices = @transform_1, window_bounds = array<i64: 256, 32>}, {pipeline_mode = #tpu.pipeline_mode<synchronous>, transform_indices = @transform_2, window_bounds = array<i64: 256, 1>}, {pipeline_mode = #tpu.pipeline_mode<synchronous>, transform_indices = @transform_3, window_bounds = array<i64: 256, 1>}, {transform_indices = @transform_4, window_bounds = array<i64: 1>}, {transform_indices = @transform_5, window_bounds = array<i64: 1, 1, 8>}]} {
    %c0 = arith.constant 0 : index
    %c0_0 = arith.constant 0 : index
    %0 = vector.load %arg3[%c0, %c0_0] : memref<256x32xf32, #tpu.memory_space<vmem>>, vector<256x32xf32>
    %1 = arith.truncf %0 : vector<256x32xf32> to vector<256x32xbf16>
    %c0_1 = arith.constant 0 : index
    %c0_2 = arith.constant 0 : index
    %2 = vector.load %arg2[%c0_1, %c0_2] : memref<8x32xf32, #tpu.memory_space<vmem>>, vector<8x32xf32>
    %3 = arith.truncf %2 : vector<8x32xf32> to vector<8x32xbf16>
    %cst = arith.constant dense<0.000000e+00> : vector<256x8xf32>
    %4 = tpu.matmul %1, %3, %cst {dimension_numbers = #tpu.dot_dimension_numbers<[1], [1], [0], [0], [0, 0, 1, 0], [], []>} : vector<256x32xbf16>, vector<8x32xbf16>, vector<256x8xf32> -> vector<256x8xf32>
    %c0_3 = arith.constant 0 : index
    %c0_4 = arith.constant 0 : index
    %5 = vector.load %arg4[%c0_3, %c0_4] : memref<256x1xf32, #tpu.memory_space<vmem>>, vector<256x1xf32>
    %6 = vector.broadcast %5 : vector<256x1xf32> to vector<256x8xf32>
    %7 = arith.addf %4, %6 : vector<256x8xf32>
    %cst_5 = arith.constant 0.000000e+00 : f32
    %8 = vector.broadcast %cst_5 : f32 to vector<256x8xf32>
    %9 = arith.maximumf %7, %8 : vector<256x8xf32>
    %c0_6 = arith.constant 0 : index
    %c0_7 = arith.constant 0 : index
    %10 = vector.load %arg5[%c0_6, %c0_7] : memref<256x1xf32, #tpu.memory_space<vmem>>, vector<256x1xf32>
    %11 = vector.broadcast %10 : vector<256x1xf32> to vector<256x8xf32>
    %12 = arith.mulf %9, %11 : vector<256x8xf32>
    %cst_8 = arith.constant dense<0.000000e+00> : vector<8xf32>
    %13 = vector.multi_reduction <add>, %12, %cst_8 [0] : vector<256x8xf32> to vector<8xf32>
    %14 = vector.shape_cast %13 : vector<8xf32> to vector<1x8xf32>
    %c0_9 = arith.constant 0 : index
    %15 = memref.load %arg6[%c0_9] : memref<1xf32, #tpu.memory_space<smem>>
    %16 = vector.broadcast %15 : f32 to vector<1x8xf32>
    %17 = arith.addf %14, %16 : vector<1x8xf32>
    %18 = vector.shape_cast %17 : vector<1x8xf32> to vector<1x1x8xf32>
    %c0_10 = arith.constant 0 : index
    %c0_11 = arith.constant 0 : index
    %c0_12 = arith.constant 0 : index
    %19 = vector.load %arg7[%c0_10, %c0_11, %c0_12] : memref<1x1x8xf32, #tpu.memory_space<vmem>>, vector<1x1x8xf32>
    tpu.vector_store %arg7[%c0_10, %c0_11, %c0_12], %18 {strides = array<i32>} : memref<1x1x8xf32, #tpu.memory_space<vmem>>, vector<1x1x8xf32>,
    return
  }
  func.func @transform_0(%arg0: i32, %arg1: i32) -> (i32, i32) {
    %c0_i32 = arith.constant 0 : i32
    return %arg0, %arg1 : i32, i32
  }
  func.func @transform_1(%arg0: i32, %arg1: i32) -> (i32, i32) {
    %c0_i32 = arith.constant 0 : i32
    %c0_i32_0 = arith.constant 0 : i32
    return %c0_i32, %arg1 : i32, i32
  }
  func.func @transform_2(%arg0: i32, %arg1: i32) -> (i32, i32) {
    %c0_i32 = arith.constant 0 : i32
    %c0_i32_0 = arith.constant 0 : i32
    %c0_i32_1 = arith.constant 0 : i32
    return %c0_i32, %c0_i32_0 : i32, i32
  }
  func.func @transform_3(%arg0: i32, %arg1: i32) -> (i32, i32) {
    %c0_i32 = arith.constant 0 : i32
    %c0_i32_0 = arith.constant 0 : i32
    %c0_i32_1 = arith.constant 0 : i32
    return %c0_i32, %c0_i32_0 : i32, i32
  }
  func.func @transform_4(%arg0: i32, %arg1: i32) -> i32 {
    %c0_i32 = arith.constant 0 : i32
    %c0_i32_0 = arith.constant 0 : i32
    return %c0_i32 : i32
  }
  func.func @transform_5(%arg0: i32, %arg1: i32) -> (i32, i32, i32) {
    %c0_i32 = arith.constant 0 : i32
    %c0_i32_0 = arith.constant 0 : i32
    %c0_i32_1 = arith.constant 0 : i32
    return %arg0, %c0_i32, %c0_i32_0 : i32, i32, i32
  }
}

</mosaic_0001>

<llo_original>
// kernel: tpu_custom_call.1
$region0: #{tpu_custom_call.1}
  #allocation0 [shape = 'u32[]', space=smem, size = 0x4, offset = 0x4, fixed_abs, tag = 'smem constant byte address 0x4 - core index']
  #allocation1 [shape = 'u32[72,128]{1,0:T(1,128)}', space=vmem, size = 0x9000, scoped, tag = 'internal scratch']
  #allocation2 [shape = 'f32[1]{0:T(128)S(6)}', space=smem, size = 0x200, scoped, tag = 'scoped memory for tpu_custom_call.1']
  %s0 = inlined_call_operand.vmem [shape: f32[8,32], index: 0, kind: input, shape index: {}]
  %s1 = inlined_call_operand.vmem [shape: f32[256,32], index: 1, kind: input, shape index: {}]
  %s2 = inlined_call_operand.vmem [shape: f32[256,1], index: 2, kind: input, shape index: {}]
  %s3 = inlined_call_operand.vmem [shape: f32[256,1], index: 3, kind: input, shape index: {}]
  %s4 = inlined_call_operand.<no memory space> [shape: f32[1], index: 4, kind: input, shape index: {}]
  %s5 = inlined_call_operand.hbm [shape: f32[1,1,8], index: 5, kind: output, shape index: {}]
  %s6 = sld [smem:[#allocation0]]
  $region30: #{tpu_custom_call.1} parent=0
    _
  %s8 = ssub.s32 1, %s6
  %s9 = scalar_select 0, %s8, %s6
  %10 = sst [smem:[#allocation2]] %s4
  $region1: #{tpu_custom_call.1} parent=0
    #allocation3 [shape = 'u8[512]{0}', space=vmem, size = 0x400, scoped, tag = 'output window, operand 0, single buffered']
    #allocation4 [shape = 's32[1]{0}', space=sflag, size = 0x4, scoped, tag = 'scoped memory for tpu_custom_call.1']
    %11 = vsyncpa [#allocation4], 0
    // Predicated region
    $region2: #{tpu_custom_call.1} parent=1 // pred_check
      _
    $region3: #{tpu_custom_call.1} parent=1 // pred_check_branch
      %13 = sbr.rel (0) target = $region5
    $region4: #{tpu_custom_call.1} parent=1 // pred_region
      _
    $region5: #{tpu_custom_call.1} parent=1 // pred_fallthru
      _
    // Predicated region
    $region6: #{tpu_custom_call.1} parent=1 // pred_check
      _
    $region7: #{tpu_custom_call.1} parent=1 // pred_check_branch
      %15 = sbr.rel (0) target = $region9
    $region8: #{tpu_custom_call.1} parent=1 // pred_region
      _
    $region9: #{tpu_custom_call.1} parent=1 // pred_fallthru
      _
    // Predicated region
    $region10: #{tpu_custom_call.1} parent=1 // pred_check
      _
    $region11: #{tpu_custom_call.1} parent=1 // pred_check_branch
      %17 = sbr.rel (0) target = $region13
    $region12: #{tpu_custom_call.1} parent=1 // pred_region
      _
    $region13: #{tpu_custom_call.1} parent=1 // pred_fallthru
      _
    // Predicated region
    $region14: #{tpu_custom_call.1} parent=1 // pred_check
      _
    $region15: #{tpu_custom_call.1} parent=1 // pred_check_branch
      %19 = sbr.rel (0) target = $region17
    $region16: #{tpu_custom_call.1} parent=1 // pred_region
      _
    $region17: #{tpu_custom_call.1} parent=1 // pred_fallthru
      _
    // Predicated region
    $region18: #{tpu_custom_call.1} parent=1 // pred_check
      _
    $region19: #{tpu_custom_call.1} parent=1 // pred_check_branch
      %21 = sbr.rel (0) target = $region21
    $region20: #{tpu_custom_call.1} parent=1 // pred_region
      _
    $region21: #{tpu_custom_call.1} parent=1 // pred_fallthru
      _
    %v23 = vld [vmem:[%s1] sm:$0xff]
    %v24 = vld [vmem:[%s1 + $0x8] sm:$0xff]
    %v25 = vld [vmem:[%s1 + $0x10] sm:$0xff]
    %v26 = vld [vmem:[%s1 + $0x18] sm:$0xff]
    %v27 = vld [vmem:[%s1 + $0x20] sm:$0xff]
    %v28 = vld [vmem:[%s1 + $0x28] sm:$0xff]
    %v29 = vld [vmem:[%s1 + $0x30] sm:$0xff]
    %v30 = vld [vmem:[%s1 + $0x38] sm:$0xff]
    %v31 = vld [vmem:[%s1 + $0x40] sm:$0xff]
    %v32 = vld [vmem:[%s1 + $0x48] sm:$0xff]
    %v33 = vld [vmem:[%s1 + $0x50] sm:$0xff]
    %v34 = vld [vmem:[%s1 + $0x58] sm:$0xff]
    %v35 = vld [vmem:[%s1 + $0x60] sm:$0xff]
    %v36 = vld [vmem:[%s1 + $0x68] sm:$0xff]
    %v37 = vld [vmem:[%s1 + $0x70] sm:$0xff]
    %v38 = vld [vmem:[%s1 + $0x78] sm:$0xff]
    %v39 = vld [vmem:[%s1 + $0x80] sm:$0xff]
    %v40 = vld [vmem:[%s1 + $0x88] sm:$0xff]
    %v41 = vld [vmem:[%s1 + $0x90] sm:$0xff]
    %v42 = vld [vmem:[%s1 + $0x98] sm:$0xff]
    %v43 = vld [vmem:[%s1 + $0xa0] sm:$0xff]
    %v44 = vld [vmem:[%s1 + $0xa8] sm:$0xff]
    %v45 = vld [vmem:[%s1 + $0xb0] sm:$0xff]
    %v46 = vld [vmem:[%s1 + $0xb8] sm:$0xff]
    %v47 = vld [vmem:[%s1 + $0xc0] sm:$0xff]
    %v48 = vld [vmem:[%s1 + $0xc8] sm:$0xff]
    %v49 = vld [vmem:[%s1 + $0xd0] sm:$0xff]
    %v50 = vld [vmem:[%s1 + $0xd8] sm:$0xff]
    %v51 = vld [vmem:[%s1 + $0xe0] sm:$0xff]
    %v52 = vld [vmem:[%s1 + $0xe8] sm:$0xff]
    %v53 = vld [vmem:[%s1 + $0xf0] sm:$0xff]
    %v54 = vld [vmem:[%s1 + $0xf8] sm:$0xff]
    %v55 = vpack.c.bf16 %v24, %v23
    %v56 = vpack.c.bf16 %v26, %v25
    %v57 = vpack.c.bf16 %v28, %v27
    %v58 = vpack.c.bf16 %v30, %v29
    %v59 = vpack.c.bf16 %v32, %v31
    %v60 = vpack.c.bf16 %v34, %v33
    %v61 = vpack.c.bf16 %v36, %v35
    %v62 = vpack.c.bf16 %v38, %v37
    %v63 = vpack.c.bf16 %v40, %v39
    %v64 = vpack.c.bf16 %v42, %v41
    %v65 = vpack.c.bf16 %v44, %v43
    %v66 = vpack.c.bf16 %v46, %v45
    %v67 = vpack.c.bf16 %v48, %v47
    %v68 = vpack.c.bf16 %v50, %v49
    %v69 = vpack.c.bf16 %v52, %v51
    %v70 = vpack.c.bf16 %v54, %v53
    %v71 = vld [vmem:[%s0] sm:$0xff]
    %v72 = vpack.c.bf16 %v71, %v71
    %v73 = vld [vmem:[%s2] sm:$0xff]
    %v74 = vld [vmem:[%s2 + $0x8] sm:$0xff]
    %v75 = vld [vmem:[%s2 + $0x10] sm:$0xff]
    %v76 = vld [vmem:[%s2 + $0x18] sm:$0xff]
    %v77 = vld [vmem:[%s2 + $0x20] sm:$0xff]
    %v78 = vld [vmem:[%s2 + $0x28] sm:$0xff]
    %v79 = vld [vmem:[%s2 + $0x30] sm:$0xff]
    %v80 = vld [vmem:[%s2 + $0x38] sm:$0xff]
    %v81 = vld [vmem:[%s2 + $0x40] sm:$0xff]
    %v82 = vld [vmem:[%s2 + $0x48] sm:$0xff]
    %v83 = vld [vmem:[%s2 + $0x50] sm:$0xff]
    %v84 = vld [vmem:[%s2 + $0x58] sm:$0xff]
    %v85 = vld [vmem:[%s2 + $0x60] sm:$0xff]
    %v86 = vld [vmem:[%s2 + $0x68] sm:$0xff]
    %v87 = vld [vmem:[%s2 + $0x70] sm:$0xff]
    %v88 = vld [vmem:[%s2 + $0x78] sm:$0xff]
    %v89 = vld [vmem:[%s2 + $0x80] sm:$0xff]
    %v90 = vld [vmem:[%s2 + $0x88] sm:$0xff]
    %v91 = vld [vmem:[%s2 + $0x90] sm:$0xff]
    %v92 = vld [vmem:[%s2 + $0x98] sm:$0xff]
    %v93 = vld [vmem:[%s2 + $0xa0] sm:$0xff]
    %v94 = vld [vmem:[%s2 + $0xa8] sm:$0xff]
    %v95 = vld [vmem:[%s2 + $0xb0] sm:$0xff]
    %v96 = vld [vmem:[%s2 + $0xb8] sm:$0xff]
    %v97 = vld [vmem:[%s2 + $0xc0] sm:$0xff]
    %v98 = vld [vmem:[%s2 + $0xc8] sm:$0xff]
    %v99 = vld [vmem:[%s2 + $0xd0] sm:$0xff]
    %v100 = vld [vmem:[%s2 + $0xd8] sm:$0xff]
    %v101 = vld [vmem:[%s2 + $0xe0] sm:$0xff]
    %v102 = vld [vmem:[%s2 + $0xe8] sm:$0xff]
    %v103 = vld [vmem:[%s2 + $0xf0] sm:$0xff]
    %v104 = vld [vmem:[%s2 + $0xf8] sm:$0xff]
    %106 = vset.pattern.permute.xlu0 0
    %107 = vperm.xlu0 %106, %v73
    %v108 = vpop.permute.xlu0 %107
    %111 = vset.pattern.permute.xlu0 0
    %112 = vperm.xlu0 %111, %v74
    %v113 = vpop.permute.xlu0 %112
    %116 = vset.pattern.permute.xlu0 0
    %117 = vperm.xlu0 %116, %v75
    %v118 = vpop.permute.xlu0 %117
    %121 = vset.pattern.permute.xlu0 0
    %122 = vperm.xlu0 %121, %v76
    %v123 = vpop.permute.xlu0 %122
    %126 = vset.pattern.permute.xlu0 0
    %127 = vperm.xlu0 %126, %v77
    %v128 = vpop.permute.xlu0 %127
    %131 = vset.pattern.permute.xlu0 0
    %132 = vperm.xlu0 %131, %v78
    %v133 = vpop.permute.xlu0 %132
    %136 = vset.pattern.permute.xlu0 0
    %137 = vperm.xlu0 %136, %v79
    %v138 = vpop.permute.xlu0 %137
    %141 = vset.pattern.permute.xlu0 0
    %142 = vperm.xlu0 %141, %v80
    %v143 = vpop.permute.xlu0 %142
    %146 = vset.pattern.permute.xlu0 0
    %147 = vperm.xlu0 %146, %v81
    %v148 = vpop.permute.xlu0 %147
    %151 = vset.pattern.permute.xlu0 0
    %152 = vperm.xlu0 %151, %v82
    %v153 = vpop.permute.xlu0 %152
    %156 = vset.pattern.permute.xlu0 0
    %157 = vperm.xlu0 %156, %v83
    %v158 = vpop.permute.xlu0 %157
    %161 = vset.pattern.permute.xlu0 0
    %162 = vperm.xlu0 %161, %v84
    %v163 = vpop.permute.xlu0 %162
    %166 = vset.pattern.permute.xlu0 0
    %167 = vperm.xlu0 %166, %v85
    %v168 = vpop.permute.xlu0 %167
    %171 = vset.pattern.permute.xlu0 0
    %172 = vperm.xlu0 %171, %v86
    %v173 = vpop.permute.xlu0 %172
    %176 = vset.pattern.permute.xlu0 0
    %177 = vperm.xlu0 %176, %v87
    %v178 = vpop.permute.xlu0 %177
    %181 = vset.pattern.permute.xlu0 0
    %182 = vperm.xlu0 %181, %v88
    %v183 = vpop.permute.xlu0 %182
    %186 = vset.pattern.permute.xlu0 0
    %187 = vperm.xlu0 %186, %v89
    %v188 = vpop.permute.xlu0 %187
    %191 = vset.pattern.permute.xlu0 0
    %192 = vperm.xlu0 %191, %v90
    %v193 = vpop.permute.xlu0 %192
    %196 = vset.pattern.permute.xlu0 0
    %197 = vperm.xlu0 %196, %v91
    %v198 = vpop.permute.xlu0 %197
    %201 = vset.pattern.permute.xlu0 0
    %202 = vperm.xlu0 %201, %v92
    %v203 = vpop.permute.xlu0 %202
    %206 = vset.pattern.permute.xlu0 0
    %207 = vperm.xlu0 %206, %v93
    %v208 = vpop.permute.xlu0 %207
    %211 = vset.pattern.permute.xlu0 0
    %212 = vperm.xlu0 %211, %v94
    %v213 = vpop.permute.xlu0 %212
    %216 = vset.pattern.permute.xlu0 0
    %217 = vperm.xlu0 %216, %v95
    %v218 = vpop.permute.xlu0 %217
    %221 = vset.pattern.permute.xlu0 0
    %222 = vperm.xlu0 %221, %v96
    %v223 = vpop.permute.xlu0 %222
    %226 = vset.pattern.permute.xlu0 0
    %227 = vperm.xlu0 %226, %v97
    %v228 = vpop.permute.xlu0 %227
    %231 = vset.pattern.permute.xlu0 0
    %232 = vperm.xlu0 %231, %v98
    %v233 = vpop.permute.xlu0 %232
    %236 = vset.pattern.permute.xlu0 0
    %237 = vperm.xlu0 %236, %v99
    %v238 = vpop.permute.xlu0 %237
    %241 = vset.pattern.permute.xlu0 0
    %242 = vperm.xlu0 %241, %v100
    %v243 = vpop.permute.xlu0 %242
    %246 = vset.pattern.permute.xlu0 0
    %247 = vperm.xlu0 %246, %v101
    %v248 = vpop.permute.xlu0 %247
    %251 = vset.pattern.permute.xlu0 0
    %252 = vperm.xlu0 %251, %v102
    %v253 = vpop.permute.xlu0 %252
    %256 = vset.pattern.permute.xlu0 0
    %257 = vperm.xlu0 %256, %v103
    %v258 = vpop.permute.xlu0 %257
    %261 = vset.pattern.permute.xlu0 0
    %262 = vperm.xlu0 %261, %v104
    %v263 = vpop.permute.xlu0 %262
    %vm265 = vcmask 261120
    %v267 = vsel %vm265, %v55, 0
    %v270 = vsel %vm265, %v56, 0
    %v273 = vsel %vm265, %v57, 0
    %v276 = vsel %vm265, %v58, 0
    %v279 = vsel %vm265, %v59, 0
    %v282 = vsel %vm265, %v60, 0
    %v285 = vsel %vm265, %v61, 0
    %v288 = vsel %vm265, %v62, 0
    %v291 = vsel %vm265, %v63, 0
    %v294 = vsel %vm265, %v64, 0
    %v297 = vsel %vm265, %v65, 0
    %v300 = vsel %vm265, %v66, 0
    %v303 = vsel %vm265, %v67, 0
    %v306 = vsel %vm265, %v68, 0
    %v309 = vsel %vm265, %v69, 0
    %v312 = vsel %vm265, %v70, 0
    %v315 = vsel %vm265, %v72, 0
    %317 = vmatpush.bf16.xpose.msra.mxu0 0
    %318 = vmatpush.bf16.xpose.msra.mxu0 0
    %319 = vmatpush.bf16.xpose.msra.mxu0 0
    %320 = vmatpush.bf16.xpose.msra.mxu0 0
    %321 = vmatpush.bf16.xpose.msra.mxu0 0
    %322 = vmatpush.bf16.xpose.msra.mxu0 0
    %323 = vmatpush.bf16.xpose.msra.mxu0 0
    %324 = vmatpush.bf16.xpose.msra.mxu0 %v315
    %325 = vmatmul.bf16.gmra.mxu0 %v267
    %v326 = vpop.f32.mrf.mxu0
    %v327 = vadd.f32 %v108, %v326
    %v328 = vpop.f32.mrf.mxu0
    %v329 = vadd.f32 %v113, %v328
    %330 = vmatmul.bf16.gmra.mxu0 %v270
    %v331 = vpop.f32.mrf.mxu0
    %v332 = vadd.f32 %v118, %v331
    %v333 = vpop.f32.mrf.mxu0
    %v334 = vadd.f32 %v123, %v333
    %335 = vmatmul.bf16.gmra.mxu0 %v273
    %v336 = vpop.f32.mrf.mxu0
    %v337 = vadd.f32 %v128, %v336
    %v338 = vpop.f32.mrf.mxu0
    %v339 = vadd.f32 %v133, %v338
    %340 = vmatmul.bf16.gmra.mxu0 %v276
    %v341 = vpop.f32.mrf.mxu0
    %v342 = vadd.f32 %v138, %v341
    %v343 = vpop.f32.mrf.mxu0
    %v344 = vadd.f32 %v143, %v343
    %345 = vmatmul.bf16.gmra.mxu0 %v279
    %v346 = vpop.f32.mrf.mxu0
    %v347 = vadd.f32 %v148, %v346
    %v348 = vpop.f32.mrf.mxu0
    %v349 = vadd.f32 %v153, %v348
    %350 = vmatmul.bf16.gmra.mxu0 %v282
    %v351 = vpop.f32.mrf.mxu0
    %v352 = vadd.f32 %v158, %v351
    %v353 = vpop.f32.mrf.mxu0
    %v354 = vadd.f32 %v163, %v353
    %355 = vmatmul.bf16.gmra.mxu0 %v285
    %v356 = vpop.f32.mrf.mxu0
    %v357 = vadd.f32 %v168, %v356
    %v358 = vpop.f32.mrf.mxu0
    %v359 = vadd.f32 %v173, %v358
    %360 = vmatmul.bf16.gmra.mxu0 %v288
    %v361 = vpop.f32.mrf.mxu0
    %v362 = vadd.f32 %v178, %v361
    %v363 = vpop.f32.mrf.mxu0
    %v364 = vadd.f32 %v183, %v363
    %365 = vmatmul.bf16.gmra.mxu0 %v291
    %v366 = vpop.f32.mrf.mxu0
    %v367 = vadd.f32 %v188, %v366
    %v368 = vpop.f32.mrf.mxu0
    %v369 = vadd.f32 %v193, %v368
    %370 = vmatmul.bf16.gmra.mxu0 %v294
    %v371 = vpop.f32.mrf.mxu0
    %v372 = vadd.f32 %v198, %v371
    %v373 = vpop.f32.mrf.mxu0
    %v374 = vadd.f32 %v203, %v373
    %375 = vmatmul.bf16.gmra.mxu0 %v297
    %v376 = vpop.f32.mrf.mxu0
    %v377 = vadd.f32 %v208, %v376
    %v378 = vpop.f32.mrf.mxu0
    %v379 = vadd.f32 %v213, %v378
    %380 = vmatmul.bf16.gmra.mxu0 %v300
    %v381 = vpop.f32.mrf.mxu0
    %v382 = vadd.f32 %v218, %v381
    %v383 = vpop.f32.mrf.mxu0
    %v384 = vadd.f32 %v223, %v383
    %385 = vmatmul.bf16.gmra.mxu0 %v303
    %v386 = vpop.f32.mrf.mxu0
    %v387 = vadd.f32 %v228, %v386
    %v388 = vpop.f32.mrf.mxu0
    %v389 = vadd.f32 %v233, %v388
    %390 = vmatmul.bf16.gmra.mxu0 %v306
    %v391 = vpop.f32.mrf.mxu0
    %v392 = vadd.f32 %v238, %v391
    %v393 = vpop.f32.mrf.mxu0
    %v394 = vadd.f32 %v243, %v393
    %395 = vmatmul.bf16.gmra.mxu0 %v309
    %v396 = vpop.f32.mrf.mxu0
    %v397 = vadd.f32 %v248, %v396
    %v398 = vpop.f32.mrf.mxu0
    %v399 = vadd.f32 %v253, %v398
    %400 = vmatmul.bf16.gmra.mxu0 %v312
    %v401 = vpop.f32.mrf.mxu0
    %v402 = vadd.f32 %v258, %v401
    %v403 = vpop.f32.mrf.mxu0
    %v404 = vadd.f32 %v263, %v403
    %405 = vdwg.mxu0
    %v406 = vmax.f32 %v327, 0.0
    %v407 = vmax.f32 %v329, 0.0
    %v408 = vmax.f32 %v332, 0.0
    %v409 = vmax.f32 %v334, 0.0
    %v410 = vmax.f32 %v337, 0.0
    %v411 = vmax.f32 %v339, 0.0
    %v412 = vmax.f32 %v342, 0.0
    %v413 = vmax.f32 %v344, 0.0
    %v414 = vmax.f32 %v347, 0.0
    %v415 = vmax.f32 %v349, 0.0
    %v416 = vmax.f32 %v352, 0.0
    %v417 = vmax.f32 %v354, 0.0
    %v418 = vmax.f32 %v357, 0.0
    %v419 = vmax.f32 %v359, 0.0
    %v420 = vmax.f32 %v362, 0.0
    %v421 = vmax.f32 %v364, 0.0
    %v422 = vmax.f32 %v367, 0.0
    %v423 = vmax.f32 %v369, 0.0
    %v424 = vmax.f32 %v372, 0.0
    %v425 = vmax.f32 %v374, 0.0
    %v426 = vmax.f32 %v377, 0.0
    %v427 = vmax.f32 %v379, 0.0
    %v428 = vmax.f32 %v382, 0.0
    %v429 = vmax.f32 %v384, 0.0
    %v430 = vmax.f32 %v387, 0.0
    %v431 = vmax.f32 %v389, 0.0
    %v432 = vmax.f32 %v392, 0.0
    %v433 = vmax.f32 %v394, 0.0
    %v434 = vmax.f32 %v397, 0.0
    %v435 = vmax.f32 %v399, 0.0
    %v436 = vmax.f32 %v402, 0.0
    %v437 = vmax.f32 %v404, 0.0
    %v438 = vld [vmem:[%s3] sm:$0xff]
    %v439 = vld [vmem:[%s3 + $0x8] sm:$0xff]
    %v440 = vld [vmem:[%s3 + $0x10] sm:$0xff]
    %v441 = vld [vmem:[%s3 + $0x18] sm:$0xff]
    %v442 = vld [vmem:[%s3 + $0x20] sm:$0xff]
    %v443 = vld [vmem:[%s3 + $0x28] sm:$0xff]
    %v444 = vld [vmem:[%s3 + $0x30] sm:$0xff]
    %v445 = vld [vmem:[%s3 + $0x38] sm:$0xff]
    %v446 = vld [vmem:[%s3 + $0x40] sm:$0xff]
    %v447 = vld [vmem:[%s3 + $0x48] sm:$0xff]
    %v448 = vld [vmem:[%s3 + $0x50] sm:$0xff]
    %v449 = vld [vmem:[%s3 + $0x58] sm:$0xff]
    %v450 = vld [vmem:[%s3 + $0x60] sm:$0xff]
    %v451 = vld [vmem:[%s3 + $0x68] sm:$0xff]
    %v452 = vld [vmem:[%s3 + $0x70] sm:$0xff]
    %v453 = vld [vmem:[%s3 + $0x78] sm:$0xff]
    %v454 = vld [vmem:[%s3 + $0x80] sm:$0xff]
    %v455 = vld [vmem:[%s3 + $0x88] sm:$0xff]
    %v456 = vld [vmem:[%s3 + $0x90] sm:$0xff]
    %v457 = vld [vmem:[%s3 + $0x98] sm:$0xff]
    %v458 = vld [vmem:[%s3 + $0xa0] sm:$0xff]
    %v459 = vld [vmem:[%s3 + $0xa8] sm:$0xff]
    %v460 = vld [vmem:[%s3 + $0xb0] sm:$0xff]
    %v461 = vld [vmem:[%s3 + $0xb8] sm:$0xff]
    %v462 = vld [vmem:[%s3 + $0xc0] sm:$0xff]
    %v463 = vld [vmem:[%s3 + $0xc8] sm:$0xff]
    %v464 = vld [vmem:[%s3 + $0xd0] sm:$0xff]
    %v465 = vld [vmem:[%s3 + $0xd8] sm:$0xff]
    %v466 = vld [vmem:[%s3 + $0xe0] sm:$0xff]
    %v467 = vld [vmem:[%s3 + $0xe8] sm:$0xff]
    %v468 = vld [vmem:[%s3 + $0xf0] sm:$0xff]
    %v469 = vld [vmem:[%s3 + $0xf8] sm:$0xff]
    %471 = vset.pattern.permute.xlu0 0
    %472 = vperm.xlu0 %471, %v438
    %v473 = vpop.permute.xlu0 %472
    %476 = vset.pattern.permute.xlu0 0
    %477 = vperm.xlu0 %476, %v439
    %v478 = vpop.permute.xlu0 %477
    %481 = vset.pattern.permute.xlu0 0
    %482 = vperm.xlu0 %481, %v440
    %v483 = vpop.permute.xlu0 %482
    %486 = vset.pattern.permute.xlu0 0
    %487 = vperm.xlu0 %486, %v441
    %v488 = vpop.permute.xlu0 %487
    %491 = vset.pattern.permute.xlu0 0
    %492 = vperm.xlu0 %491, %v442
    %v493 = vpop.permute.xlu0 %492
    %496 = vset.pattern.permute.xlu0 0
    %497 = vperm.xlu0 %496, %v443
    %v498 = vpop.permute.xlu0 %497
    %501 = vset.pattern.permute.xlu0 0
    %502 = vperm.xlu0 %501, %v444
    %v503 = vpop.permute.xlu0 %502
    %506 = vset.pattern.permute.xlu0 0
    %507 = vperm.xlu0 %506, %v445
    %v508 = vpop.permute.xlu0 %507
    %511 = vset.pattern.permute.xlu0 0
    %512 = vperm.xlu0 %511, %v446
    %v513 = vpop.permute.xlu0 %512
    %516 = vset.pattern.permute.xlu0 0
    %517 = vperm.xlu0 %516, %v447
    %v518 = vpop.permute.xlu0 %517
    %521 = vset.pattern.permute.xlu0 0
    %522 = vperm.xlu0 %521, %v448
    %v523 = vpop.permute.xlu0 %522
    %526 = vset.pattern.permute.xlu0 0
    %527 = vperm.xlu0 %526, %v449
    %v528 = vpop.permute.xlu0 %527
    %531 = vset.pattern.permute.xlu0 0
    %532 = vperm.xlu0 %531, %v450
    %v533 = vpop.permute.xlu0 %532
    %536 = vset.pattern.permute.xlu0 0
    %537 = vperm.xlu0 %536, %v451
    %v538 = vpop.permute.xlu0 %537
    %541 = vset.pattern.permute.xlu0 0
    %542 = vperm.xlu0 %541, %v452
    %v543 = vpop.permute.xlu0 %542
    %546 = vset.pattern.permute.xlu0 0
    %547 = vperm.xlu0 %546, %v453
    %v548 = vpop.permute.xlu0 %547
    %551 = vset.pattern.permute.xlu0 0
    %552 = vperm.xlu0 %551, %v454
    %v553 = vpop.permute.xlu0 %552
    %556 = vset.pattern.permute.xlu0 0
    %557 = vperm.xlu0 %556, %v455
    %v558 = vpop.permute.xlu0 %557
    %561 = vset.pattern.permute.xlu0 0
    %562 = vperm.xlu0 %561, %v456
    %v563 = vpop.permute.xlu0 %562
    %566 = vset.pattern.permute.xlu0 0
    %567 = vperm.xlu0 %566, %v457
    %v568 = vpop.permute.xlu0 %567
    %571 = vset.pattern.permute.xlu0 0
    %572 = vperm.xlu0 %571, %v458
    %v573 = vpop.permute.xlu0 %572
    %576 = vset.pattern.permute.xlu0 0
    %577 = vperm.xlu0 %576, %v459
    %v578 = vpop.permute.xlu0 %577
    %581 = vset.pattern.permute.xlu0 0
    %582 = vperm.xlu0 %581, %v460
    %v583 = vpop.permute.xlu0 %582
    %586 = vset.pattern.permute.xlu0 0
    %587 = vperm.xlu0 %586, %v461
    %v588 = vpop.permute.xlu0 %587
    %591 = vset.pattern.permute.xlu0 0
    %592 = vperm.xlu0 %591, %v462
    %v593 = vpop.permute.xlu0 %592
    %596 = vset.pattern.permute.xlu0 0
    %597 = vperm.xlu0 %596, %v463
    %v598 = vpop.permute.xlu0 %597
    %601 = vset.pattern.permute.xlu0 0
    %602 = vperm.xlu0 %601, %v464
    %v603 = vpop.permute.xlu0 %602
    %606 = vset.pattern.permute.xlu0 0
    %607 = vperm.xlu0 %606, %v465
    %v608 = vpop.permute.xlu0 %607
    %611 = vset.pattern.permute.xlu0 0
    %612 = vperm.xlu0 %611, %v466
    %v613 = vpop.permute.xlu0 %612
    %616 = vset.pattern.permute.xlu0 0
    %617 = vperm.xlu0 %616, %v467
    %v618 = vpop.permute.xlu0 %617
    %621 = vset.pattern.permute.xlu0 0
    %622 = vperm.xlu0 %621, %v468
    %v623 = vpop.permute.xlu0 %622
    %626 = vset.pattern.permute.xlu0 0
    %627 = vperm.xlu0 %626, %v469
    %v628 = vpop.permute.xlu0 %627
    %v630 = vmul.f32 %v406, %v473
    %v631 = vmul.f32 %v407, %v478
    %v632 = vmul.f32 %v408, %v483
    %v633 = vmul.f32 %v409, %v488
    %v634 = vmul.f32 %v410, %v493
    %v635 = vmul.f32 %v411, %v498
    %v636 = vmul.f32 %v412, %v503
    %v637 = vmul.f32 %v413, %v508
    %v638 = vmul.f32 %v414, %v513
    %v639 = vmul.f32 %v415, %v518
    %v640 = vmul.f32 %v416, %v523
    %v641 = vmul.f32 %v417, %v528
    %v642 = vmul.f32 %v418, %v533
    %v643 = vmul.f32 %v419, %v538
    %v644 = vmul.f32 %v420, %v543
    %v645 = vmul.f32 %v421, %v548
    %v646 = vmul.f32 %v422, %v553
    %v647 = vmul.f32 %v423, %v558
    %v648 = vmul.f32 %v424, %v563
    %v649 = vmul.f32 %v425, %v568
    %v650 = vmul.f32 %v426, %v573
    %v651 = vmul.f32 %v427, %v578
    %v652 = vmul.f32 %v428, %v583
    %v653 = vmul.f32 %v429, %v588
    %v654 = vmul.f32 %v430, %v593
    %v655 = vmul.f32 %v431, %v598
    %v656 = vmul.f32 %v432, %v603
    %v657 = vmul.f32 %v433, %v608
    %v658 = vmul.f32 %v434, %v613
    %v659 = vmul.f32 %v435, %v618
    %v660 = vmul.f32 %v436, %v623
    %v661 = vmul.f32 %v437, %v628
    %vm662 = vcmask 64512
    %v663 = vsel %vm662, %v630, 0.0
    %v664 = vsel %vm662, %v631, 0.0
    %v665 = vadd.f32 %v663, %v664
    %v666 = vsel %vm662, %v632, 0.0
    %v667 = vadd.f32 %v665, %v666
    %v668 = vsel %vm662, %v633, 0.0
    %v669 = vadd.f32 %v667, %v668
    %v670 = vsel %vm662, %v634, 0.0
    %v671 = vadd.f32 %v669, %v670
    %v672 = vsel %vm662, %v635, 0.0
    %v673 = vadd.f32 %v671, %v672
    %v674 = vsel %vm662, %v636, 0.0
    %v675 = vadd.f32 %v673, %v674
    %v676 = vsel %vm662, %v637, 0.0
    %v677 = vadd.f32 %v675, %v676
    %v678 = vsel %vm662, %v638, 0.0
    %v679 = vadd.f32 %v677, %v678
    %v680 = vsel %vm662, %v639, 0.0
    %v681 = vadd.f32 %v679, %v680
    %v682 = vsel %vm662, %v640, 0.0
    %v683 = vadd.f32 %v681, %v682
    %v684 = vsel %vm662, %v641, 0.0
    %v685 = vadd.f32 %v683, %v684
    %v686 = vsel %vm662, %v642, 0.0
    %v687 = vadd.f32 %v685, %v686
    %v688 = vsel %vm662, %v643, 0.0
    %v689 = vadd.f32 %v687, %v688
    %v690 = vsel %vm662, %v644, 0.0
    %v691 = vadd.f32 %v689, %v690
    %v692 = vsel %vm662, %v645, 0.0
    %v693 = vadd.f32 %v691, %v692
    %v694 = vsel %vm662, %v646, 0.0
    %v695 = vadd.f32 %v693, %v694
    %v696 = vsel %vm662, %v647, 0.0
    %v697 = vadd.f32 %v695, %v696
    %v698 = vsel %vm662, %v648, 0.0
    %v699 = vadd.f32 %v697, %v698
    %v700 = vsel %vm662, %v649, 0.0
    %v701 = vadd.f32 %v699, %v700
    %v702 = vsel %vm662, %v650, 0.0
    %v703 = vadd.f32 %v701, %v702
    %v704 = vsel %vm662, %v651, 0.0
    %v705 = vadd.f32 %v703, %v704
    %v706 = vsel %vm662, %v652, 0.0
    %v707 = vadd.f32 %v705, %v706
    %v708 = vsel %vm662, %v653, 0.0
    %v709 = vadd.f32 %v707, %v708
    %v710 = vsel %vm662, %v654, 0.0
    %v711 = vadd.f32 %v709, %v710
    %v712 = vsel %vm662, %v655, 0.0
    %v713 = vadd.f32 %v711, %v712
    %v714 = vsel %vm662, %v656, 0.0
    %v715 = vadd.f32 %v713, %v714
    %v716 = vsel %vm662, %v657, 0.0
    %v717 = vadd.f32 %v715, %v716
    %v718 = vsel %vm662, %v658, 0.0
    %v719 = vadd.f32 %v717, %v718
    %v720 = vsel %vm662, %v659, 0.0
    %v721 = vadd.f32 %v719, %v720
    %v722 = vsel %vm662, %v660, 0.0
    %v723 = vadd.f32 %v721, %v722
    %v724 = vsel %vm662, %v661, 0.0
    %v725 = vadd.f32 %v723, %v724
    %v726 = vrot.slane %v725, 4
    %v727 = vadd.f32 %v725, %v726
    %v728 = vrot.slane %v727, 2
    %v729 = vadd.f32 %v727, %v728
    %v730 = vrot.slane %v729, 1
    %v731 = vadd.f32 %v729, %v730
    %s732 = sld [smem:[#allocation2]]
    %v733 = vstv %s732
    %v734 = vadd.f32 %v731, %v733
    %vm735 = vcmask 57344
    %736 = vst.msk [vmem:[#allocation3] sm:$0x1] %vm735, %v734
    // Predicated region
    $region22: #{tpu_custom_call.1} parent=1 // pred_check
      _
    $region23: #{tpu_custom_call.1} parent=1 // pred_check_branch
      %738 = sbr.rel (0) target = $region25
    $region24: #{tpu_custom_call.1} parent=1 // pred_region
      %740 = vsyncadd [#allocation4], 0
      %s742 = sshll.u32 [#allocation3], 4
      %s743 = int_to_ptr.vmem [resolvable:$true] %s742
      %s744 = sshll.u32 %s5, 4
      %s745 = int_to_ptr.hbm [resolvable:$true] %s744
      %747 = dma.vmem_to_hbm [thread:$0]  %s743, 16, %s745, [#allocation4]
    $region25: #{tpu_custom_call.1} parent=1 // pred_fallthru
      _
    // Predicated region
    $region26: #{tpu_custom_call.1} parent=1 // pred_check
      _
    $region27: #{tpu_custom_call.1} parent=1 // pred_check_branch
      %749 = sbr.rel (0) target = $region29
    $region28: #{tpu_custom_call.1} parent=1 // pred_region
      %751 = dma.done [#allocation4], 16
    $region29: #{tpu_custom_call.1} parent=1 // pred_fallthru
      _
    %752 = vsyncpa [#allocation4], 1

// kernel: tpu_custom_call.1
$region0: #{tpu_custom_call.1}
  #allocation0 [shape = 'u32[]', space=smem, size = 0x4, offset = 0x4, fixed_abs, tag = 'smem constant byte address 0x4 - core index']
  #allocation1 [shape = 'u32[72,128]{1,0:T(1,128)}', space=vmem, size = 0x9000, scoped, tag = 'internal scratch']
  #allocation2 [shape = 'f32[1]{0:T(128)S(6)}', space=smem, size = 0x200, scoped, tag = 'scoped memory for tpu_custom_call.1']
  %s0 = inlined_call_operand.vmem [shape: f32[8,32], index: 0, kind: input, shape index: {}]
  %s1 = inlined_call_operand.vmem [shape: f32[256,32], index: 1, kind: input, shape index: {}]
  %s2 = inlined_call_operand.vmem [shape: f32[256,1], index: 2, kind: input, shape index: {}]
  %s3 = inlined_call_operand.vmem [shape: f32[256,1], index: 3, kind: input, shape index: {}]
  %s4 = inlined_call_operand.<no memory space> [shape: f32[1], index: 4, kind: input, shape index: {}]
  %s5 = inlined_call_operand.hbm [shape: f32[1,1,8], index: 5, kind: output, shape index: {}]
  %s6 = sld [smem:[#allocation0]]
  $region30: #{tpu_custom_call.1} parent=0
    _
  %s8 = ssub.s32 1, %s6
  %s9 = scalar_select 0, %s8, %s6
  %10 = sst [smem:[#allocation2]] %s4
  $region1: #{tpu_custom_call.1} parent=0
    #allocation3 [shape = 'u8[512]{0}', space=vmem, size = 0x400, scoped, tag = 'output window, operand 0, single buffered']
    #allocation4 [shape = 's32[1]{0}', space=sflag, size = 0x4, scoped, tag = 'scoped memory for tpu_custom_call.1']
    %11 = vsyncpa [#allocation4], 0
    // Predicated region
    $region2: #{tpu_custom_call.1} parent=1 // pred_check
      _
    $region3: #{tpu_custom_call.1} parent=1 // pred_check_branch
      %13 = sbr.rel (0) target = $region5
    $region4: #{tpu_custom_call.1} parent=1 // pred_region
      _
    $region5: #{tpu_custom_call.1} parent=1 // pred_fallthru
      _
    // Predicated region
    $region6: #{tpu_custom_call.1} parent=1 // pred_check
      _
    $region7: #{tpu_custom_call.1} parent=1 // pred_check_branch
      %15 = sbr.rel (0) target = $region9
    $region8: #{tpu_custom_call.1} parent=1 // pred_region
      _
    $region9: #{tpu_custom_call.1} parent=1 // pred_fallthru
      _
    // Predicated region
    $region10: #{tpu_custom_call.1} parent=1 // pred_check
      _
    $region11: #{tpu_custom_call.1} parent=1 // pred_check_branch
      %17 = sbr.rel (0) target = $region13
    $region12: #{tpu_custom_call.1} parent=1 // pred_region
      _
    $region13: #{tpu_custom_call.1} parent=1 // pred_fallthru
      _
    // Predicated region
    $region14: #{tpu_custom_call.1} parent=1 // pred_check
      _
    $region15: #{tpu_custom_call.1} parent=1 // pred_check_branch
      %19 = sbr.rel (0) target = $region17
    $region16: #{tpu_custom_call.1} parent=1 // pred_region
      _
    $region17: #{tpu_custom_call.1} parent=1 // pred_fallthru
      _
    // Predicated region
    $region18: #{tpu_custom_call.1} parent=1 // pred_check
      _
    $region19: #{tpu_custom_call.1} parent=1 // pred_check_branch
      %21 = sbr.rel (0) target = $region21
    $region20: #{tpu_custom_call.1} parent=1 // pred_region
      _
    $region21: #{tpu_custom_call.1} parent=1 // pred_fallthru
      _
    %v23 = vld [vmem:[%s1] sm:$0xff]
    %v24 = vld [vmem:[%s1 + $0x8] sm:$0xff]
    %v25 = vld [vmem:[%s1 + $0x10] sm:$0xff]
    %v26 = vld [vmem:[%s1 + $0x18] sm:$0xff]
    %v27 = vld [vmem:[%s1 + $0x20] sm:$0xff]
    %v28 = vld [vmem:[%s1 + $0x28] sm:$0xff]
    %v29 = vld [vmem:[%s1 + $0x30] sm:$0xff]
    %v30 = vld [vmem:[%s1 + $0x38] sm:$0xff]
    %v31 = vld [vmem:[%s1 + $0x40] sm:$0xff]
    %v32 = vld [vmem:[%s1 + $0x48] sm:$0xff]
    %v33 = vld [vmem:[%s1 + $0x50] sm:$0xff]
    %v34 = vld [vmem:[%s1 + $0x58] sm:$0xff]
    %v35 = vld [vmem:[%s1 + $0x60] sm:$0xff]
    %v36 = vld [vmem:[%s1 + $0x68] sm:$0xff]
    %v37 = vld [vmem:[%s1 + $0x70] sm:$0xff]
    %v38 = vld [vmem:[%s1 + $0x78] sm:$0xff]
    %v39 = vld [vmem:[%s1 + $0x80] sm:$0xff]
    %v40 = vld [vmem:[%s1 + $0x88] sm:$0xff]
    %v41 = vld [vmem:[%s1 + $0x90] sm:$0xff]
    %v42 = vld [vmem:[%s1 + $0x98] sm:$0xff]
    %v43 = vld [vmem:[%s1 + $0xa0] sm:$0xff]
    %v44 = vld [vmem:[%s1 + $0xa8] sm:$0xff]
    %v45 = vld [vmem:[%s1 + $0xb0] sm:$0xff]
    %v46 = vld [vmem:[%s1 + $0xb8] sm:$0xff]
    %v47 = vld [vmem:[%s1 + $0xc0] sm:$0xff]
    %v48 = vld [vmem:[%s1 + $0xc8] sm:$0xff]
    %v49 = vld [vmem:[%s1 + $0xd0] sm:$0xff]
    %v50 = vld [vmem:[%s1 + $0xd8] sm:$0xff]
    %v51 = vld [vmem:[%s1 + $0xe0] sm:$0xff]
    %v52 = vld [vmem:[%s1 + $0xe8] sm:$0xff]
    %v53 = vld [vmem:[%s1 + $0xf0] sm:$0xff]
    %v54 = vld [vmem:[%s1 + $0xf8] sm:$0xff]
    %v55 = vpack.c.bf16 %v24, %v23
    %v56 = vpack.c.bf16 %v26, %v25
    %v57 = vpack.c.bf16 %v28, %v27
    %v58 = vpack.c.bf16 %v30, %v29
    %v59 = vpack.c.bf16 %v32, %v31
    %v60 = vpack.c.bf16 %v34, %v33
    %v61 = vpack.c.bf16 %v36, %v35
    %v62 = vpack.c.bf16 %v38, %v37
    %v63 = vpack.c.bf16 %v40, %v39
    %v64 = vpack.c.bf16 %v42, %v41
    %v65 = vpack.c.bf16 %v44, %v43
    %v66 = vpack.c.bf16 %v46, %v45
    %v67 = vpack.c.bf16 %v48, %v47
    %v68 = vpack.c.bf16 %v50, %v49
    %v69 = vpack.c.bf16 %v52, %v51
    %v70 = vpack.c.bf16 %v54, %v53
    %v71 = vld [vmem:[%s0] sm:$0xff]
    %v72 = vpack.c.bf16 %v71, %v71
    %v73 = vld [vmem:[%s2] sm:$0xff]
    %v74 = vld [vmem:[%s2 + $0x8] sm:$0xff]
    %v75 = vld [vmem:[%s2 + $0x10] sm:$0xff]
    %v76 = vld [vmem:[%s2 + $0x18] sm:$0xff]
    %v77 = vld [vmem:[%s2 + $0x20] sm:$0xff]
    %v78 = vld [vmem:[%s2 + $0x28] sm:$0xff]
    %v79 = vld [vmem:[%s2 + $0x30] sm:$0xff]
    %v80 = vld [vmem:[%s2 + $0x38] sm:$0xff]
    %v81 = vld [vmem:[%s2 + $0x40] sm:$0xff]
    %v82 = vld [vmem:[%s2 + $0x48] sm:$0xff]
    %v83 = vld [vmem:[%s2 + $0x50] sm:$0xff]
    %v84 = vld [vmem:[%s2 + $0x58] sm:$0xff]
    %v85 = vld [vmem:[%s2 + $0x60] sm:$0xff]
    %v86 = vld [vmem:[%s2 + $0x68] sm:$0xff]
    %v87 = vld [vmem:[%s2 + $0x70] sm:$0xff]
    %v88 = vld [vmem:[%s2 + $0x78] sm:$0xff]
    %v89 = vld [vmem:[%s2 + $0x80] sm:$0xff]
    %v90 = vld [vmem:[%s2 + $0x88] sm:$0xff]
    %v91 = vld [vmem:[%s2 + $0x90] sm:$0xff]
    %v92 = vld [vmem:[%s2 + $0x98] sm:$0xff]
    %v93 = vld [vmem:[%s2 + $0xa0] sm:$0xff]
    %v94 = vld [vmem:[%s2 + $0xa8] sm:$0xff]
    %v95 = vld [vmem:[%s2 + $0xb0] sm:$0xff]
    %v96 = vld [vmem:[%s2 + $0xb8] sm:$0xff]
    %v97 = vld [vmem:[%s2 + $0xc0] sm:$0xff]
    %v98 = vld [vmem:[%s2 + $0xc8] sm:$0xff]
    %v99 = vld [vmem:[%s2 + $0xd0] sm:$0xff]
    %v100 = vld [vmem:[%s2 + $0xd8] sm:$0xff]
    %v101 = vld [vmem:[%s2 + $0xe0] sm:$0xff]
    %v102 = vld [vmem:[%s2 + $0xe8] sm:$0xff]
    %v103 = vld [vmem:[%s2 + $0xf0] sm:$0xff]
    %v104 = vld [vmem:[%s2 + $0xf8] sm:$0xff]
    %106 = vset.pattern.permute.xlu0 0
    %107 = vperm.xlu0 %106, %v73
    %v108 = vpop.permute.xlu0 %107
    %111 = vset.pattern.permute.xlu0 0
    %112 = vperm.xlu0 %111, %v74
    %v113 = vpop.permute.xlu0 %112
    %116 = vset.pattern.permute.xlu0 0
    %117 = vperm.xlu0 %116, %v75
    %v118 = vpop.permute.xlu0 %117
    %121 = vset.pattern.permute.xlu0 0
    %122 = vperm.xlu0 %121, %v76
    %v123 = vpop.permute.xlu0 %122
    %126 = vset.pattern.permute.xlu0 0
    %127 = vperm.xlu0 %126, %v77
    %v128 = vpop.permute.xlu0 %127
    %131 = vset.pattern.permute.xlu0 0
    %132 = vperm.xlu0 %131, %v78
    %v133 = vpop.permute.xlu0 %132
    %136 = vset.pattern.permute.xlu0 0
    %137 = vperm.xlu0 %136, %v79
    %v138 = vpop.permute.xlu0 %137
    %141 = vset.pattern.permute.xlu0 0
    %142 = vperm.xlu0 %141, %v80
    %v143 = vpop.permute.xlu0 %142
    %146 = vset.pattern.permute.xlu0 0
    %147 = vperm.xlu0 %146, %v81
    %v148 = vpop.permute.xlu0 %147
    %151 = vset.pattern.permute.xlu0 0
    %152 = vperm.xlu0 %151, %v82
    %v153 = vpop.permute.xlu0 %152
    %156 = vset.pattern.permute.xlu0 0
    %157 = vperm.xlu0 %156, %v83
    %v158 = vpop.permute.xlu0 %157
    %161 = vset.pattern.permute.xlu0 0
    %162 = vperm.xlu0 %161, %v84
    %v163 = vpop.permute.xlu0 %162
    %166 = vset.pattern.permute.xlu0 0
    %167 = vperm.xlu0 %166, %v85
    %v168 = vpop.permute.xlu0 %167
    %171 = vset.pattern.permute.xlu0 0
    %172 = vperm.xlu0 %171, %v86
    %v173 = vpop.permute.xlu0 %172
    %176 = vset.pattern.permute.xlu0 0
    %177 = vperm.xlu0 %176, %v87
    %v178 = vpop.permute.xlu0 %177
    %181 = vset.pattern.permute.xlu0 0
    %182 = vperm.xlu0 %181, %v88
    %v183 = vpop.permute.xlu0 %182
    %186 = vset.pattern.permute.xlu0 0
    %187 = vperm.xlu0 %186, %v89
    %v188 = vpop.permute.xlu0 %187
    %191 = vset.pattern.permute.xlu0 0
    %192 = vperm.xlu0 %191, %v90
    %v193 = vpop.permute.xlu0 %192
    %196 = vset.pattern.permute.xlu0 0
    %197 = vperm.xlu0 %196, %v91
    %v198 = vpop.permute.xlu0 %197
    %201 = vset.pattern.permute.xlu0 0
    %202 = vperm.xlu0 %201, %v92
    %v203 = vpop.permute.xlu0 %202
    %206 = vset.pattern.permute.xlu0 0
    %207 = vperm.xlu0 %206, %v93
    %v208 = vpop.permute.xlu0 %207
    %211 = vset.pattern.permute.xlu0 0
    %212 = vperm.xlu0 %211, %v94
    %v213 = vpop.permute.xlu0 %212
    %216 = vset.pattern.permute.xlu0 0
    %217 = vperm.xlu0 %216, %v95
    %v218 = vpop.permute.xlu0 %217
    %221 = vset.pattern.permute.xlu0 0
    %222 = vperm.xlu0 %221, %v96
    %v223 = vpop.permute.xlu0 %222
    %226 = vset.pattern.permute.xlu0 0
    %227 = vperm.xlu0 %226, %v97
    %v228 = vpop.permute.xlu0 %227
    %231 = vset.pattern.permute.xlu0 0
    %232 = vperm.xlu0 %231, %v98
    %v233 = vpop.permute.xlu0 %232
    %236 = vset.pattern.permute.xlu0 0
    %237 = vperm.xlu0 %236, %v99
    %v238 = vpop.permute.xlu0 %237
    %241 = vset.pattern.permute.xlu0 0
    %242 = vperm.xlu0 %241, %v100
    %v243 = vpop.permute.xlu0 %242
    %246 = vset.pattern.permute.xlu0 0
    %247 = vperm.xlu0 %246, %v101
    %v248 = vpop.permute.xlu0 %247
    %251 = vset.pattern.permute.xlu0 0
    %252 = vperm.xlu0 %251, %v102
    %v253 = vpop.permute.xlu0 %252
    %256 = vset.pattern.permute.xlu0 0
    %257 = vperm.xlu0 %256, %v103
    %v258 = vpop.permute.xlu0 %257
    %261 = vset.pattern.permute.xlu0 0
    %262 = vperm.xlu0 %261, %v104
    %v263 = vpop.permute.xlu0 %262
    %vm265 = vcmask 261120
    %v267 = vsel %vm265, %v55, 0
    %v270 = vsel %vm265, %v56, 0
    %v273 = vsel %vm265, %v57, 0
    %v276 = vsel %vm265, %v58, 0
    %v279 = vsel %vm265, %v59, 0
    %v282 = vsel %vm265, %v60, 0
    %v285 = vsel %vm265, %v61, 0
    %v288 = vsel %vm265, %v62, 0
    %v291 = vsel %vm265, %v63, 0
    %v294 = vsel %vm265, %v64, 0
    %v297 = vsel %vm265, %v65, 0
    %v300 = vsel %vm265, %v66, 0
    %v303 = vsel %vm265, %v67, 0
    %v306 = vsel %vm265, %v68, 0
    %v309 = vsel %vm265, %v69, 0
    %v312 = vsel %vm265, %v70, 0
    %v315 = vsel %vm265, %v72, 0
    %317 = vmatpush.bf16.xpose.msra.mxu0 0
    %318 = vmatpush.bf16.xpose.msra.mxu0 0
    %319 = vmatpush.bf16.xpose.msra.mxu0 0
    %320 = vmatpush.bf16.xpose.msra.mxu0 0
    %321 = vmatpush.bf16.xpose.msra.mxu0 0
    %322 = vmatpush.bf16.xpose.msra.mxu0 0
    %323 = vmatpush.bf16.xpose.msra.mxu0 0
    %324 = vmatpush.bf16.xpose.msra.mxu0 %v315
    %325 = vmatmul.bf16.gmra.mxu0 %v267
    %v326 = vpop.f32.mrf.mxu0
    %v327 = vadd.f32 %v108, %v326
    %v328 = vpop.f32.mrf.mxu0
    %v329 = vadd.f32 %v113, %v328
    %330 = vmatmul.bf16.gmra.mxu0 %v270
    %v331 = vpop.f32.mrf.mxu0
    %v332 = vadd.f32 %v118, %v331
    %v333 = vpop.f32.mrf.mxu0
    %v334 = vadd.f32 %v123, %v333
    %335 = vmatmul.bf16.gmra.mxu0 %v273
    %v336 = vpop.f32.mrf.mxu0
    %v337 = vadd.f32 %v128, %v336
    %v338 = vpop.f32.mrf.mxu0
    %v339 = vadd.f32 %v133, %v338
    %340 = vmatmul.bf16.gmra.mxu0 %v276
    %v341 = vpop.f32.mrf.mxu0
    %v342 = vadd.f32 %v138, %v341
    %v343 = vpop.f32.mrf.mxu0
    %v344 = vadd.f32 %v143, %v343
    %345 = vmatmul.bf16.gmra.mxu0 %v279
    %v346 = vpop.f32.mrf.mxu0
    %v347 = vadd.f32 %v148, %v346
    %v348 = vpop.f32.mrf.mxu0
    %v349 = vadd.f32 %v153, %v348
    %350 = vmatmul.bf16.gmra.mxu0 %v282
    %v351 = vpop.f32.mrf.mxu0
    %v352 = vadd.f32 %v158, %v351
    %v353 = vpop.f32.mrf.mxu0
    %v354 = vadd.f32 %v163, %v353
    %355 = vmatmul.bf16.gmra.mxu0 %v285
    %v356 = vpop.f32.mrf.mxu0
    %v357 = vadd.f32 %v168, %v356
    %v358 = vpop.f32.mrf.mxu0
    %v359 = vadd.f32 %v173, %v358
    %360 = vmatmul.bf16.gmra.mxu0 %v288
    %v361 = vpop.f32.mrf.mxu0
    %v362 = vadd.f32 %v178, %v361
    %v363 = vpop.f32.mrf.mxu0
    %v364 = vadd.f32 %v183, %v363
    %365 = vmatmul.bf16.gmra.mxu0 %v291
    %v366 = vpop.f32.mrf.mxu0
    %v367 = vadd.f32 %v188, %v366
    %v368 = vpop.f32.mrf.mxu0
    %v369 = vadd.f32 %v193, %v368
    %370 = vmatmul.bf16.gmra.mxu0 %v294
    %v371 = vpop.f32.mrf.mxu0
    %v372 = vadd.f32 %v198, %v371
    %v373 = vpop.f32.mrf.mxu0
    %v374 = vadd.f32 %v203, %v373
    %375 = vmatmul.bf16.gmra.mxu0 %v297
    %v376 = vpop.f32.mrf.mxu0
    %v377 = vadd.f32 %v208, %v376
    %v378 = vpop.f32.mrf.mxu0
    %v379 = vadd.f32 %v213, %v378
    %380 = vmatmul.bf16.gmra.mxu0 %v300
    %v381 = vpop.f32.mrf.mxu0
    %v382 = vadd.f32 %v218, %v381
    %v383 = vpop.f32.mrf.mxu0
    %v384 = vadd.f32 %v223, %v383
    %385 = vmatmul.bf16.gmra.mxu0 %v303
    %v386 = vpop.f32.mrf.mxu0
    %v387 = vadd.f32 %v228, %v386
    %v388 = vpop.f32.mrf.mxu0
    %v389 = vadd.f32 %v233, %v388
    %390 = vmatmul.bf16.gmra.mxu0 %v306
    %v391 = vpop.f32.mrf.mxu0
    %v392 = vadd.f32 %v238, %v391
    %v393 = vpop.f32.mrf.mxu0
    %v394 = vadd.f32 %v243, %v393
    %395 = vmatmul.bf16.gmra.mxu0 %v309
    %v396 = vpop.f32.mrf.mxu0
    %v397 = vadd.f32 %v248, %v396
    %v398 = vpop.f32.mrf.mxu0
    %v399 = vadd.f32 %v253, %v398
    %400 = vmatmul.bf16.gmra.mxu0 %v312
    %v401 = vpop.f32.mrf.mxu0
    %v402 = vadd.f32 %v258, %v401
    %v403 = vpop.f32.mrf.mxu0
    %v404 = vadd.f32 %v263, %v403
    %405 = vdwg.mxu0
    %v406 = vmax.f32 %v327, 0.0
    %v407 = vmax.f32 %v329, 0.0
    %v408 = vmax.f32 %v332, 0.0
    %v409 = vmax.f32 %v334, 0.0
    %v410 = vmax.f32 %v337, 0.0
    %v411 = vmax.f32 %v339, 0.0
    %v412 = vmax.f32 %v342, 0.0
    %v413 = vmax.f32 %v344, 0.0
    %v414 = vmax.f32 %v347, 0.0
    %v415 = vmax.f32 %v349, 0.0
    %v416 = vmax.f32 %v352, 0.0
    %v417 = vmax.f32 %v354, 0.0
    %v418 = vmax.f32 %v357, 0.0
    %v419 = vmax.f32 %v359, 0.0
    %v420 = vmax.f32 %v362, 0.0
    %v421 = vmax.f32 %v364, 0.0
    %v422 = vmax.f32 %v367, 0.0
    %v423 = vmax.f32 %v369, 0.0
    %v424 = vmax.f32 %v372, 0.0
    %v425 = vmax.f32 %v374, 0.0
    %v426 = vmax.f32 %v377, 0.0
    %v427 = vmax.f32 %v379, 0.0
    %v428 = vmax.f32 %v382, 0.0
    %v429 = vmax.f32 %v384, 0.0
    %v430 = vmax.f32 %v387, 0.0
    %v431 = vmax.f32 %v389, 0.0
    %v432 = vmax.f32 %v392, 0.0
    %v433 = vmax.f32 %v394, 0.0
    %v434 = vmax.f32 %v397, 0.0
    %v435 = vmax.f32 %v399, 0.0
    %v436 = vmax.f32 %v402, 0.0
    %v437 = vmax.f32 %v404, 0.0
    %v438 = vld [vmem:[%s3] sm:$0xff]
    %v439 = vld [vmem:[%s3 + $0x8] sm:$0xff]
    %v440 = vld [vmem:[%s3 + $0x10] sm:$0xff]
    %v441 = vld [vmem:[%s3 + $0x18] sm:$0xff]
    %v442 = vld [vmem:[%s3 + $0x20] sm:$0xff]
    %v443 = vld [vmem:[%s3 + $0x28] sm:$0xff]
    %v444 = vld [vmem:[%s3 + $0x30] sm:$0xff]
    %v445 = vld [vmem:[%s3 + $0x38] sm:$0xff]
    %v446 = vld [vmem:[%s3 + $0x40] sm:$0xff]
    %v447 = vld [vmem:[%s3 + $0x48] sm:$0xff]
    %v448 = vld [vmem:[%s3 + $0x50] sm:$0xff]
    %v449 = vld [vmem:[%s3 + $0x58] sm:$0xff]
    %v450 = vld [vmem:[%s3 + $0x60] sm:$0xff]
    %v451 = vld [vmem:[%s3 + $0x68] sm:$0xff]
    %v452 = vld [vmem:[%s3 + $0x70] sm:$0xff]
    %v453 = vld [vmem:[%s3 + $0x78] sm:$0xff]
    %v454 = vld [vmem:[%s3 + $0x80] sm:$0xff]
    %v455 = vld [vmem:[%s3 + $0x88] sm:$0xff]
    %v456 = vld [vmem:[%s3 + $0x90] sm:$0xff]
    %v457 = vld [vmem:[%s3 + $0x98] sm:$0xff]
    %v458 = vld [vmem:[%s3 + $0xa0] sm:$0xff]
    %v459 = vld [vmem:[%s3 + $0xa8] sm:$0xff]
    %v460 = vld [vmem:[%s3 + $0xb0] sm:$0xff]
    %v461 = vld [vmem:[%s3 + $0xb8] sm:$0xff]
    %v462 = vld [vmem:[%s3 + $0xc0] sm:$0xff]
    %v463 = vld [vmem:[%s3 + $0xc8] sm:$0xff]
    %v464 = vld [vmem:[%s3 + $0xd0] sm:$0xff]
    %v465 = vld [vmem:[%s3 + $0xd8] sm:$0xff]
    %v466 = vld [vmem:[%s3 + $0xe0] sm:$0xff]
    %v467 = vld [vmem:[%s3 + $0xe8] sm:$0xff]
    %v468 = vld [vmem:[%s3 + $0xf0] sm:$0xff]
    %v469 = vld [vmem:[%s3 + $0xf8] sm:$0xff]
    %471 = vset.pattern.permute.xlu0 0
    %472 = vperm.xlu0 %471, %v438
    %v473 = vpop.permute.xlu0 %472
    %476 = vset.pattern.permute.xlu0 0
    %477 = vperm.xlu0 %476, %v439
    %v478 = vpop.permute.xlu0 %477
    %481 = vset.pattern.permute.xlu0 0
    %482 = vperm.xlu0 %481, %v440
    %v483 = vpop.permute.xlu0 %482
    %486 = vset.pattern.permute.xlu0 0
    %487 = vperm.xlu0 %486, %v441
    %v488 = vpop.permute.xlu0 %487
    %491 = vset.pattern.permute.xlu0 0
    %492 = vperm.xlu0 %491, %v442
    %v493 = vpop.permute.xlu0 %492
    %496 = vset.pattern.permute.xlu0 0
    %497 = vperm.xlu0 %496, %v443
    %v498 = vpop.permute.xlu0 %497
    %501 = vset.pattern.permute.xlu0 0
    %502 = vperm.xlu0 %501, %v444
    %v503 = vpop.permute.xlu0 %502
    %506 = vset.pattern.permute.xlu0 0
    %507 = vperm.xlu0 %506, %v445
    %v508 = vpop.permute.xlu0 %507
    %511 = vset.pattern.permute.xlu0 0
    %512 = vperm.xlu0 %511, %v446
    %v513 = vpop.permute.xlu0 %512
    %516 = vset.pattern.permute.xlu0 0
    %517 = vperm.xlu0 %516, %v447
    %v518 = vpop.permute.xlu0 %517
    %521 = vset.pattern.permute.xlu0 0
    %522 = vperm.xlu0 %521, %v448
    %v523 = vpop.permute.xlu0 %522
    %526 = vset.pattern.permute.xlu0 0
    %527 = vperm.xlu0 %526, %v449
    %v528 = vpop.permute.xlu0 %527
    %531 = vset.pattern.permute.xlu0 0
    %532 = vperm.xlu0 %531, %v450
    %v533 = vpop.permute.xlu0 %532
    %536 = vset.pattern.permute.xlu0 0
    %537 = vperm.xlu0 %536, %v451
    %v538 = vpop.permute.xlu0 %537
    %541 = vset.pattern.permute.xlu0 0
    %542 = vperm.xlu0 %541, %v452
    %v543 = vpop.permute.xlu0 %542
    %546 = vset.pattern.permute.xlu0 0
    %547 = vperm.xlu0 %546, %v453
    %v548 = vpop.permute.xlu0 %547
    %551 = vset.pattern.permute.xlu0 0
    %552 = vperm.xlu0 %551, %v454
    %v553 = vpop.permute.xlu0 %552
    %556 = vset.pattern.permute.xlu0 0
    %557 = vperm.xlu0 %556, %v455
    %v558 = vpop.permute.xlu0 %557
    %561 = vset.pattern.permute.xlu0 0
    %562 = vperm.xlu0 %561, %v456
    %v563 = vpop.permute.xlu0 %562
    %566 = vset.pattern.permute.xlu0 0
    %567 = vperm.xlu0 %566, %v457
    %v568 = vpop.permute.xlu0 %567
    %571 = vset.pattern.permute.xlu0 0
    %572 = vperm.xlu0 %571, %v458
    %v573 = vpop.permute.xlu0 %572
    %576 = vset.pattern.permute.xlu0 0
    %577 = vperm.xlu0 %576, %v459
    %v578 = vpop.permute.xlu0 %577
    %581 = vset.pattern.permute.xlu0 0
    %582 = vperm.xlu0 %581, %v460
    %v583 = vpop.permute.xlu0 %582
    %586 = vset.pattern.permute.xlu0 0
    %587 = vperm.xlu0 %586, %v461
    %v588 = vpop.permute.xlu0 %587
    %591 = vset.pattern.permute.xlu0 0
    %592 = vperm.xlu0 %591, %v462
    %v593 = vpop.permute.xlu0 %592
    %596 = vset.pattern.permute.xlu0 0
    %597 = vperm.xlu0 %596, %v463
    %v598 = vpop.permute.xlu0 %597
    %601 = vset.pattern.permute.xlu0 0
    %602 = vperm.xlu0 %601, %v464
    %v603 = vpop.permute.xlu0 %602
    %606 = vset.pattern.permute.xlu0 0
    %607 = vperm.xlu0 %606, %v465
    %v608 = vpop.permute.xlu0 %607
    %611 = vset.pattern.permute.xlu0 0
    %612 = vperm.xlu0 %611, %v466
    %v613 = vpop.permute.xlu0 %612
    %616 = vset.pattern.permute.xlu0 0
    %617 = vperm.xlu0 %616, %v467
    %v618 = vpop.permute.xlu0 %617
    %621 = vset.pattern.permute.xlu0 0
    %622 = vperm.xlu0 %621, %v468
    %v623 = vpop.permute.xlu0 %622
    %626 = vset.pattern.permute.xlu0 0
    %627 = vperm.xlu0 %626, %v469
    %v628 = vpop.permute.xlu0 %627
    %v630 = vmul.f32 %v406, %v473
    %v631 = vmul.f32 %v407, %v478
    %v632 = vmul.f32 %v408, %v483
    %v633 = vmul.f32 %v409, %v488
    %v634 = vmul.f32 %v410, %v493
    %v635 = vmul.f32 %v411, %v498
    %v636 = vmul.f32 %v412, %v503
    %v637 = vmul.f32 %v413, %v508
    %v638 = vmul.f32 %v414, %v513
    %v639 = vmul.f32 %v415, %v518
    %v640 = vmul.f32 %v416, %v523
    %v641 = vmul.f32 %v417, %v528
    %v642 = vmul.f32 %v418, %v533
    %v643 = vmul.f32 %v419, %v538
    %v644 = vmul.f32 %v420, %v543
    %v645 = vmul.f32 %v421, %v548
    %v646 = vmul.f32 %v422, %v553
    %v647 = vmul.f32 %v423, %v558
    %v648 = vmul.f32 %v424, %v563
    %v649 = vmul.f32 %v425, %v568
    %v650 = vmul.f32 %v426, %v573
    %v651 = vmul.f32 %v427, %v578
    %v652 = vmul.f32 %v428, %v583
    %v653 = vmul.f32 %v429, %v588
    %v654 = vmul.f32 %v430, %v593
    %v655 = vmul.f32 %v431, %v598
    %v656 = vmul.f32 %v432, %v603
    %v657 = vmul.f32 %v433, %v608
    %v658 = vmul.f32 %v434, %v613
    %v659 = vmul.f32 %v435, %v618
    %v660 = vmul.f32 %v436, %v623
    %v661 = vmul.f32 %v437, %v628
    %vm662 = vcmask 64512
    %v663 = vsel %vm662, %v630, 0.0
    %v664 = vsel %vm662, %v631, 0.0
    %v665 = vadd.f32 %v663, %v664
    %v666 = vsel %vm662, %v632, 0.0
    %v667 = vadd.f32 %v665, %v666
    %v668 = vsel %vm662, %v633, 0.0
    %v669 = vadd.f32 %v667, %v668
    %v670 = vsel %vm662, %v634, 0.0
    %v671 = vadd.f32 %v669, %v670
    %v672 = vsel %vm662, %v635, 0.0
    %v673 = vadd.f32 %v671, %v672
    %v674 = vsel %vm662, %v636, 0.0
    %v675 = vadd.f32 %v673, %v674
    %v676 = vsel %vm662, %v637, 0.0
    %v677 = vadd.f32 %v675, %v676
    %v678 = vsel %vm662, %v638, 0.0
    %v679 = vadd.f32 %v677, %v678
    %v680 = vsel %vm662, %v639, 0.0
    %v681 = vadd.f32 %v679, %v680
    %v682 = vsel %vm662, %v640, 0.0
    %v683 = vadd.f32 %v681, %v682
    %v684 = vsel %vm662, %v641, 0.0
    %v685 = vadd.f32 %v683, %v684
    %v686 = vsel %vm662, %v642, 0.0
    %v687 = vadd.f32 %v685, %v686
    %v688 = vsel %vm662, %v643, 0.0
    %v689 = vadd.f32 %v687, %v688
    %v690 = vsel %vm662, %v644, 0.0
    %v691 = vadd.f32 %v689, %v690
    %v692 = vsel %vm662, %v645, 0.0
    %v693 = vadd.f32 %v691, %v692
    %v694 = vsel %vm662, %v646, 0.0
    %v695 = vadd.f32 %v693, %v694
    %v696 = vsel %vm662, %v647, 0.0
    %v697 = vadd.f32 %v695, %v696
    %v698 = vsel %vm662, %v648, 0.0
    %v699 = vadd.f32 %v697, %v698
    %v700 = vsel %vm662, %v649, 0.0
    %v701 = vadd.f32 %v699, %v700
    %v702 = vsel %vm662, %v650, 0.0
    %v703 = vadd.f32 %v701, %v702
    %v704 = vsel %vm662, %v651, 0.0
    %v705 = vadd.f32 %v703, %v704
    %v706 = vsel %vm662, %v652, 0.0
    %v707 = vadd.f32 %v705, %v706
    %v708 = vsel %vm662, %v653, 0.0
    %v709 = vadd.f32 %v707, %v708
    %v710 = vsel %vm662, %v654, 0.0
    %v711 = vadd.f32 %v709, %v710
    %v712 = vsel %vm662, %v655, 0.0
    %v713 = vadd.f32 %v711, %v712
    %v714 = vsel %vm662, %v656, 0.0
    %v715 = vadd.f32 %v713, %v714
    %v716 = vsel %vm662, %v657, 0.0
    %v717 = vadd.f32 %v715, %v716
    %v718 = vsel %vm662, %v658, 0.0
    %v719 = vadd.f32 %v717, %v718
    %v720 = vsel %vm662, %v659, 0.0
    %v721 = vadd.f32 %v719, %v720
    %v722 = vsel %vm662, %v660, 0.0
    %v723 = vadd.f32 %v721, %v722
    %v724 = vsel %vm662, %v661, 0.0
    %v725 = vadd.f32 %v723, %v724
    %v726 = vrot.slane %v725, 4
    %v727 = vadd.f32 %v725, %v726
    %v728 = vrot.slane %v727, 2
    %v729 = vadd.f32 %v727, %v728
    %v730 = vrot.slane %v729, 1
    %v731 = vadd.f32 %v729, %v730
    %s732 = sld [smem:[#allocation2]]
    %v733 = vstv %s732
    %v734 = vadd.f32 %v731, %v733
    %vm735 = vcmask 57344
    %736 = vst.msk [vmem:[#allocation3] sm:$0x1] %vm735, %v734
    // Predicated region
    $region22: #{tpu_custom_call.1} parent=1 // pred_check
      _
    $region23: #{tpu_custom_call.1} parent=1 // pred_check_branch
      %738 = sbr.rel (0) target = $region25
    $region24: #{tpu_custom_call.1} parent=1 // pred_region
      %740 = vsyncadd [#allocation4], 0
      %s742 = sshll.u32 [#allocation3], 4
      %s743 = int_to_ptr.vmem [resolvable:$true] %s742
      %s744 = sshll.u32 %s5, 4
      %s745 = int_to_ptr.hbm [resolvable:$true] %s744
      %747 = dma.vmem_to_hbm [thread:$0]  %s743, 16, %s745, [#allocation4]
    $region25: #{tpu_custom_call.1} parent=1 // pred_fallthru
      _
    // Predicated region
    $region26: #{tpu_custom_call.1} parent=1 // pred_check
      _
    $region27: #{tpu_custom_call.1} parent=1 // pred_check_branch
      %749 = sbr.rel (0) target = $region29
    $region28: #{tpu_custom_call.1} parent=1 // pred_region
      %751 = dma.done [#allocation4], 16
    $region29: #{tpu_custom_call.1} parent=1 // pred_fallthru
      _
    %752 = vsyncpa [#allocation4], 1

</llo_original>
